<compile_context>
chip_gen: v5e
topology: v5e:2x2
jax: 0.10.0
libtpu: 0.0.40
codegen_flags: <defaults>
</compile_context>

<pallas_src>
import math

import jax
import jax.numpy as jnp
from jax.experimental import pallas as pl
from jax.experimental.pallas import tpu as pltpu

LOG_STD_MIN = -5.0
LOG_STD_MAX = 2.0

_MAX_LANE_W = 1024          # lanes per row of the reshaped slab (multiple of 128)
_MAX_TILE_R = 1024          # sublane rows per block (multiple of 8) -> <=4 MiB f32 block
_PALLAS_MIN_ELEMS = 128 * 1024  # below this, XLA fusion beats kernel launch overhead
_VMEM_LIMIT_BYTES = 40 * 1024 * 1024  # covers 4 arrays x 2 bufs x 4 MiB, < v7x 64 MiB


def _round_up(x, m):
    return ((x + m - 1) // m) * m


def _actor_kernel(mu_ref, log_std_ref, mu_out_ref, std_out_ref):
    # Elementwise hot path (VPU + EUP). Compute in f32 for parity with the
    # PyTorch f32 reference even when I/O is bf16; casts are free VPU ops and
    # all HBM traffic stays in the caller's dtype.
    ls = log_std_ref[...].astype(jnp.float32)
    ls = jnp.tanh(ls)
    ls = LOG_STD_MIN + 0.5 * (LOG_STD_MAX - LOG_STD_MIN) * (ls + 1.0)
    std_out_ref[...] = jnp.exp(ls).astype(std_out_ref.dtype)
    mu_out_ref[...] = jnp.tanh(mu_ref[...].astype(jnp.float32)).astype(mu_out_ref.dtype)


def _reference(mu, log_std):
    ls = jnp.tanh(log_std)
    ls = LOG_STD_MIN + 0.5 * (LOG_STD_MAX - LOG_STD_MIN) * (ls + 1.0)
    return jnp.tanh(mu), jnp.exp(ls)


def _pick_lane_width(n):
    """Largest multiple-of-128 divisor of n, capped at _MAX_LANE_W (None if n%128)."""
    for w in range(_MAX_LANE_W, 0, -128):
        if n % w == 0:
            return w
    return None


def _choose_tile_rows(rows):
    """Pick (tile_r, grid_steps): big blocks, but >=2 grid steps when possible
    so the "parallel" grid axis splits across both TensorCores on v7x."""
    if rows <= 8:
        # Single full-extent block (block dim == full array dim is allowed).
        return rows, 1
    tile_r = min(_MAX_TILE_R, _round_up(pl.cdiv(rows, 2), 8))
    return tile_r, pl.cdiv(rows, tile_r)


def _pallas_flat(mu_flat, ls_flat, lane_w, out_dtype):
    """Run the kernel on 1-D, lane_w-divisible inputs; returns flat outputs."""
    n = mu_flat.shape[0]
    rows = n // lane_w
    # Zero-copy lane-dense views (n % lane_w == 0 by construction).
    mu2 = mu_flat.reshape(rows, lane_w)
    ls2 = ls_flat.reshape(rows, lane_w)

    tile_r, grid_r = _choose_tile_rows(rows)
    spec = pl.BlockSpec((tile_r, lane_w), lambda i: (i, 0))

    in_bytes = jnp.dtype(mu_flat.dtype).itemsize
    out_bytes = jnp.dtype(out_dtype).itemsize
    cost = pl.CostEstimate(
        flops=4 * n,                  # affine rescale on log_std
        transcendentals=3 * n,        # 2x tanh + 1x exp
        bytes_accessed=2 * n * in_bytes + 2 * n * out_bytes,
    )

    mu_o, std_o = pl.pallas_call(
        _actor_kernel,
        out_shape=(
            jax.ShapeDtypeStruct((rows, lane_w), out_dtype),  # squashed mu
            jax.ShapeDtypeStruct((rows, lane_w), out_dtype),  # std
        ),
        grid=(grid_r,),
        in_specs=[spec, spec],
        out_specs=(spec, spec),
        compiler_params=pltpu.CompilerParams(
            # Row tiles are independent: shard across both TensorCores on v7x.
            dimension_semantics=("parallel",),
            vmem_limit_bytes=_VMEM_LIMIT_BYTES,
        ),
        cost_estimate=cost,
    )(mu2, ls2)
    return mu_o.reshape(-1), std_o.reshape(-1)


def diag_gaussian_actor(mu, log_std, *, force_pallas=False):
    assert mu.shape == log_std.shape and mu.dtype == log_std.dtype
    orig_shape = mu.shape
    orig_dtype = mu.dtype
    n = math.prod(orig_shape)

    if n == 0:
        return _reference(mu, log_std)

    # Tiny problems: let XLA fuse the elementwise ops into the surrounding graph.
    if n < _PALLAS_MIN_ELEMS and not force_pallas:
        return _reference(mu, log_std)

    lane_w = _pick_lane_width(n)
    if lane_w is not None:
        # Fully lane-aligned: zero-copy reshape, single Pallas call.
        mu_o, std_o = _pallas_flat(
            mu.reshape(-1), log_std.reshape(-1), lane_w, orig_dtype
        )
        return mu_o.reshape(orig_shape), std_o.reshape(orig_shape)

    # n is not a multiple of 128: padding would cost extra full HBM passes, and
    # stitching a prefix + tail costs a concat pass — for a mem-bound
    # elementwise op plain XLA fusion is at the roofline already, so fall back
    # unless the caller insists on exercising the kernel.
    if not force_pallas:
        return _reference(mu, log_std)

    n_main = (n // 128) * 128
    if n_main == 0:
        return _reference(mu, log_std)
    mu_f = mu.reshape(-1)
    ls_f = log_std.reshape(-1)
    lane_w = _pick_lane_width(n_main)
    mu_main, std_main = _pallas_flat(mu_f[:n_main], ls_f[:n_main], lane_w, orig_dtype)
    mu_tail, std_tail = _reference(mu_f[n_main:], ls_f[n_main:])
    mu_o = jnp.concatenate([mu_main, mu_tail]).reshape(orig_shape)
    std_o = jnp.concatenate([std_main, std_tail]).reshape(orig_shape)
    return mu_o, std_o


if __name__ == "__main__":
    key = jax.random.PRNGKey(0)
    k1, k2, k3, k4 = jax.random.split(key, 4)

    # Small shape consistent with the module (batch=4, action_dim=32 -> 128
    # elements: lane-aligned so force_pallas exercises the kernel path).
    batch, action_dim = 4, 32
    mu = jax.random.normal(k1, (batch, action_dim), dtype=jnp.float32)
    log_std = jax.random.normal(k2, (batch, action_dim), dtype=jnp.float32)
    mu_out, std_out = jax.block_until_ready(
        diag_gaussian_actor(mu, log_std, force_pallas=True)
    )
    mu_ref, std_ref = _reference(mu, log_std)
    assert jnp.allclose(mu_out, mu_ref, atol=1e-6, rtol=1e-6)
    assert jnp.allclose(std_out, std_ref, atol=1e-6, rtol=1e-6)

    # Non-128-aligned small shape under force_pallas: prefix-kernel + tail path.
    mu_na = jax.random.normal(k1, (5, 33), dtype=jnp.float32)
    ls_na = jax.random.normal(k2, (5, 33), dtype=jnp.float32)
    mu_ona, std_ona = jax.block_until_ready(
        diag_gaussian_actor(mu_na, ls_na, force_pallas=True)
    )
    mu_rna, std_rna = _reference(mu_na, ls_na)
    assert jnp.allclose(mu_ona, mu_rna, atol=1e-6, rtol=1e-6)
    assert jnp.allclose(std_ona, std_rna, atol=1e-6, rtol=1e-6)

    # Larger shape: zero-copy lane-dense reshape, multi-step grid, f32 path.
    big_b = 16384
    mu_b = jax.random.normal(k3, (big_b, action_dim), dtype=jnp.float32)
    ls_b = jax.random.normal(k4, (big_b, action_dim), dtype=jnp.float32)
    mu_ob, std_ob = jax.block_until_ready(diag_gaussian_actor(mu_b, ls_b))
    mu_rb, std_rb = _reference(mu_b, ls_b)
    assert jnp.allclose(mu_ob, mu_rb, atol=1e-6, rtol=1e-6)
    assert jnp.allclose(std_ob, std_rb, atol=1e-6, rtol=1e-6)

    # bf16 caller: HBM traffic stays bf16 end-to-end, f32 math inside kernel.
    mu_h = mu_b.astype(jnp.bfloat16)
    ls_h = ls_b.astype(jnp.bfloat16)
    mu_oh, std_oh = jax.block_until_ready(diag_gaussian_actor(mu_h, ls_h))
    assert mu_oh.dtype == jnp.bfloat16 and std_oh.dtype == jnp.bfloat16
    mu_rh, std_rh = _reference(
        mu_h.astype(jnp.float32), ls_h.astype(jnp.float32)
    )
    assert jnp.allclose(mu_oh.astype(jnp.float32), mu_rh, atol=2e-2, rtol=2e-2)
    assert jnp.allclose(std_oh.astype(jnp.float32), std_rh, atol=2e-2, rtol=2e-2)

    print("KERNEL_OK")
</pallas_src>

<mosaic_0001>
module attributes {stable_mosaic.version = 11 : i64} {
  func.func @_actor_kernel(%arg0: i32, %arg1: memref<1x128xf32, #tpu.memory_space<vmem>>, %arg2: memref<1x128xf32, #tpu.memory_space<vmem>>, %arg3: memref<1x128xf32, #tpu.memory_space<vmem>>, %arg4: memref<1x128xf32, #tpu.memory_space<vmem>>) attributes {dimension_semantics = [#tpu.dimension_semantics<parallel>], iteration_bounds = array<i64: 1>, scalar_prefetch = 0 : i64, scratch_operands = 0 : i64, tpu.core_type = #tpu.core_type<tc>, window_params = [{transform_indices = @transform_0, window_bounds = array<i64: 1, 128>}, {transform_indices = @transform_1, window_bounds = array<i64: 1, 128>}, {transform_indices = @transform_2, window_bounds = array<i64: 1, 128>}, {transform_indices = @transform_3, window_bounds = array<i64: 1, 128>}]} {
    %c0 = arith.constant 0 : index
    %c0_0 = arith.constant 0 : index
    %0 = vector.load %arg2[%c0, %c0_0] : memref<1x128xf32, #tpu.memory_space<vmem>>, vector<1x128xf32>
    %1 = math.tanh %0 : vector<1x128xf32>
    %cst = arith.constant 1.000000e+00 : f32
    %2 = vector.broadcast %cst : f32 to vector<1x128xf32>
    %3 = arith.addf %1, %2 : vector<1x128xf32>
    %cst_1 = arith.constant 3.500000e+00 : f32
    %4 = vector.broadcast %cst_1 : f32 to vector<1x128xf32>
    %5 = arith.mulf %4, %3 : vector<1x128xf32>
    %cst_2 = arith.constant -5.000000e+00 : f32
    %6 = vector.broadcast %cst_2 : f32 to vector<1x128xf32>
    %7 = arith.addf %6, %5 : vector<1x128xf32>
    %8 = math.exp %7 : vector<1x128xf32>
    %c0_3 = arith.constant 0 : index
    %c0_4 = arith.constant 0 : index
    %9 = vector.load %arg4[%c0_3, %c0_4] : memref<1x128xf32, #tpu.memory_space<vmem>>, vector<1x128xf32>
    tpu.vector_store %arg4[%c0_3, %c0_4], %8 {strides = array<i32>} : memref<1x128xf32, #tpu.memory_space<vmem>>, vector<1x128xf32>,
    %c0_5 = arith.constant 0 : index
    %c0_6 = arith.constant 0 : index
    %10 = vector.load %arg1[%c0_5, %c0_6] : memref<1x128xf32, #tpu.memory_space<vmem>>, vector<1x128xf32>
    %11 = math.tanh %10 : vector<1x128xf32>
    %c0_7 = arith.constant 0 : index
    %c0_8 = arith.constant 0 : index
    %12 = vector.load %arg3[%c0_7, %c0_8] : memref<1x128xf32, #tpu.memory_space<vmem>>, vector<1x128xf32>
    tpu.vector_store %arg3[%c0_7, %c0_8], %11 {strides = array<i32>} : memref<1x128xf32, #tpu.memory_space<vmem>>, vector<1x128xf32>,
    return
  }
  func.func @transform_0(%arg0: i32) -> (i32, i32) {
    %c0_i32 = arith.constant 0 : i32
    %c0_i32_0 = arith.constant 0 : i32
    return %arg0, %c0_i32 : i32, i32
  }
  func.func @transform_1(%arg0: i32) -> (i32, i32) {
    %c0_i32 = arith.constant 0 : i32
    %c0_i32_0 = arith.constant 0 : i32
    return %arg0, %c0_i32 : i32, i32
  }
  func.func @transform_2(%arg0: i32) -> (i32, i32) {
    %c0_i32 = arith.constant 0 : i32
    %c0_i32_0 = arith.constant 0 : i32
    return %arg0, %c0_i32 : i32, i32
  }
  func.func @transform_3(%arg0: i32) -> (i32, i32) {
    %c0_i32 = arith.constant 0 : i32
    %c0_i32_0 = arith.constant 0 : i32
    return %arg0, %c0_i32 : i32, i32
  }
}

</mosaic_0001>

<llo_original>
// kernel: tpu_custom_call.1
$region0: #{tpu_custom_call.1}
  #allocation0 [shape = 'u32[]', space=smem, size = 0x4, offset = 0x4, fixed_abs, tag = 'smem constant byte address 0x4 - core index']
  #allocation1 [shape = 'u32[72,128]{1,0:T(1,128)}', space=vmem, size = 0x9000, scoped, tag = 'internal scratch']
  %s0 = inlined_call_operand.hbm [shape: f32[1,128], index: 0, kind: input, shape index: {}]
  %s1 = inlined_call_operand.hbm [shape: f32[1,128], index: 1, kind: input, shape index: {}]
  %s2 = inlined_call_operand.hbm [shape: f32[1,128], index: 2, kind: output, shape index: {0}]
  %s3 = inlined_call_operand.hbm [shape: f32[1,128], index: 3, kind: output, shape index: {1}]
  %4 = xla_tuple %s2, %s3
  %s5 = sld [smem:[#allocation0]]
  $region34: #{tpu_custom_call.1} parent=0
    _
  %s7 = ssub.s32 1, %s5
  %s8 = scalar_select 0, %s7, %s5
  $region1: #{tpu_custom_call.1} parent=0
    #allocation2 [shape = 'u8[512]{0}', space=vmem, size = 0x400, scoped, tag = 'input window, operand 0, single buffered']
    #allocation3 [shape = 's32[1]{0}', space=sflag, size = 0x4, scoped, tag = 'scoped memory for tpu_custom_call.1']
    #allocation4 [shape = 's32[1]{0}', space=sflag, size = 0x4, scoped, tag = 'scoped memory for tpu_custom_call.1']
    #allocation5 [shape = 'u8[512]{0}', space=vmem, size = 0x400, scoped, tag = 'input window, operand 1, single buffered']
    #allocation6 [shape = 's32[1]{0}', space=sflag, size = 0x4, scoped, tag = 'scoped memory for tpu_custom_call.1']
    #allocation7 [shape = 'u8[512]{0}', space=vmem, size = 0x400, scoped, tag = 'output window, operand 0, single buffered']
    #allocation8 [shape = 'u8[512]{0}', space=vmem, size = 0x400, scoped, tag = 'output window, operand 1, single buffered']
    #allocation9 [shape = 's32[1]{0}', space=sflag, size = 0x4, scoped, tag = 'scoped memory for tpu_custom_call.1']
    %9 = vsyncpa [#allocation3], 0
    %10 = vsyncpa [#allocation6], 0
    %11 = vsyncpa [#allocation4], 0
    %12 = vsyncpa [#allocation9], 0
    // Predicated region
    $region2: #{tpu_custom_call.1} parent=1 // pred_check
      _
    $region3: #{tpu_custom_call.1} parent=1 // pred_check_branch
      %14 = sbr.rel (0) target = $region5
    $region4: #{tpu_custom_call.1} parent=1 // pred_region
      %16 = vsyncadd [#allocation3], 0
      %s18 = sshll.u32 %s0, 4
      %s19 = int_to_ptr.hbm [resolvable:$true] %s18
      %s20 = sshll.u32 [#allocation2], 4
      %s21 = int_to_ptr.vmem [resolvable:$true] %s20
      %23 = dma.hbm_to_vmem [thread:$0]  %s19, 16, %s21, [#allocation3]
    $region5: #{tpu_custom_call.1} parent=1 // pred_fallthru
      _
    // Predicated region
    $region6: #{tpu_custom_call.1} parent=1 // pred_check
      _
    $region7: #{tpu_custom_call.1} parent=1 // pred_check_branch
      %25 = sbr.rel (0) target = $region9
    $region8: #{tpu_custom_call.1} parent=1 // pred_region
      %27 = vsyncadd [#allocation6], 0
      %s29 = sshll.u32 %s1, 4
      %s30 = int_to_ptr.hbm [resolvable:$true] %s29
      %s31 = sshll.u32 [#allocation5], 4
      %s32 = int_to_ptr.vmem [resolvable:$true] %s31
      %34 = dma.hbm_to_vmem [thread:$0]  %s30, 16, %s32, [#allocation6]
    $region9: #{tpu_custom_call.1} parent=1 // pred_fallthru
      _
    // Predicated region
    $region10: #{tpu_custom_call.1} parent=1 // pred_check
      _
    $region11: #{tpu_custom_call.1} parent=1 // pred_check_branch
      %36 = sbr.rel (0) target = $region13
    $region12: #{tpu_custom_call.1} parent=1 // pred_region
      %38 = dma.done [#allocation3], 16
    $region13: #{tpu_custom_call.1} parent=1 // pred_fallthru
      _
    // Predicated region
    $region14: #{tpu_custom_call.1} parent=1 // pred_check
      _
    $region15: #{tpu_custom_call.1} parent=1 // pred_check_branch
      %40 = sbr.rel (0) target = $region17
    $region16: #{tpu_custom_call.1} parent=1 // pred_region
      %42 = dma.done [#allocation6], 16
    $region17: #{tpu_custom_call.1} parent=1 // pred_fallthru
      _
    %v43 = vld [vmem:[#allocation5] sm:$0x1]
    %v44 = vtanh.pop %v43
    %v45 = vadd.f32 %v44, 1.0
    %v46 = vmul.f32 %v45, 3.5
    %v47 = vadd.f32 %v46, -5.0
    %v48 = vmul.f32 %v47, 1.442695
    %v49 = vpow.pop %v48
    %50 = vst [vmem:[#allocation8] sm:$0x1] %v49
    %v51 = vld [vmem:[#allocation2] sm:$0x1]
    %v52 = vtanh.pop %v51
    %53 = vst [vmem:[#allocation7] sm:$0x1] %v52
    // Predicated region
    $region18: #{tpu_custom_call.1} parent=1 // pred_check
      _
    $region19: #{tpu_custom_call.1} parent=1 // pred_check_branch
      %55 = sbr.rel (0) target = $region21
    $region20: #{tpu_custom_call.1} parent=1 // pred_region
      %57 = vsyncadd [#allocation4], 0
      %s59 = sshll.u32 [#allocation7], 4
      %s60 = int_to_ptr.vmem [resolvable:$true] %s59
      %s61 = sshll.u32 %s2, 4
      %s62 = int_to_ptr.hbm [resolvable:$true] %s61
      %64 = dma.vmem_to_hbm [thread:$0]  %s60, 16, %s62, [#allocation4]
    $region21: #{tpu_custom_call.1} parent=1 // pred_fallthru
      _
    // Predicated region
    $region22: #{tpu_custom_call.1} parent=1 // pred_check
      _
    $region23: #{tpu_custom_call.1} parent=1 // pred_check_branch
      %66 = sbr.rel (0) target = $region25
    $region24: #{tpu_custom_call.1} parent=1 // pred_region
      %68 = vsyncadd [#allocation9], 0
      %s70 = sshll.u32 [#allocation8], 4
      %s71 = int_to_ptr.vmem [resolvable:$true] %s70
      %s72 = sshll.u32 %s3, 4
      %s73 = int_to_ptr.hbm [resolvable:$true] %s72
      %75 = dma.vmem_to_hbm [thread:$0]  %s71, 16, %s73, [#allocation9]
    $region25: #{tpu_custom_call.1} parent=1 // pred_fallthru
      _
    // Predicated region
    $region26: #{tpu_custom_call.1} parent=1 // pred_check
      _
    $region27: #{tpu_custom_call.1} parent=1 // pred_check_branch
      %77 = sbr.rel (0) target = $region29
    $region28: #{tpu_custom_call.1} parent=1 // pred_region
      %79 = dma.done [#allocation4], 16
    $region29: #{tpu_custom_call.1} parent=1 // pred_fallthru
      _
    // Predicated region
    $region30: #{tpu_custom_call.1} parent=1 // pred_check
      _
    $region31: #{tpu_custom_call.1} parent=1 // pred_check_branch
      %81 = sbr.rel (0) target = $region33
    $region32: #{tpu_custom_call.1} parent=1 // pred_region
      %83 = dma.done [#allocation9], 16
    $region33: #{tpu_custom_call.1} parent=1 // pred_fallthru
      _
    %84 = vsyncpa [#allocation3], 1
    %85 = vsyncpa [#allocation6], 1
    %86 = vsyncpa [#allocation4], 1
    %87 = vsyncpa [#allocation9], 1

</llo_original>
